<compile_context>
chip_gen: v5e
topology: v5e:2x2
jax: 0.10.0
libtpu: 0.0.40
codegen_flags: <defaults>
</compile_context>

<pallas_src>
import functools

import jax
import jax.numpy as jnp
from jax import lax
from jax.experimental import pallas as pl
from jax.experimental.pallas import tpu as pltpu


# ----------------------------- Pallas kernel -------------------------------- #

def _probe_removal_kernel(h_ref, qs_ref, qt_ref, o_ref, *, strength, normalize):
    h = h_ref[...]                                                    # (TM, H) native dtype

    # coeff_j = (h . q_j) / ||q_j||^2   (Qs is pre-scaled by 1/||q||^2 in the wrapper)
    coeff = jnp.dot(h, qs_ref[...], preferred_element_type=jnp.float32)   # (TM, Rp) f32

    # projection onto span(Q):  coeff @ Q^T  (Qt is the precomputed, unscaled Q^T)
    proj = jnp.dot(coeff.astype(qt_ref.dtype), qt_ref[...],
                   preferred_element_type=jnp.float32)                    # (TM, H) f32

    h32 = h.astype(jnp.float32)
    out = h32 - jnp.float32(strength) * proj

    if normalize:
        old_sq = jnp.sum(h32 * h32, axis=-1, keepdims=True)               # (TM, 1)
        new_sq = jnp.sum(out * out, axis=-1, keepdims=True)               # (TM, 1)
        # sqrt(old) * rsqrt(new): EUP ops, eps guard avoids inf/NaN when out == 0.
        scale = jnp.sqrt(old_sq) * lax.rsqrt(jnp.maximum(new_sq, jnp.float32(1e-12)))
        out = out * scale

    o_ref[...] = out.astype(o_ref.dtype)


# ------------------------------ JAX wrapper ---------------------------------- #

def _vmem_capacity_bytes():
    try:
        return int(pltpu.get_tpu_info().vmem_capacity_bytes)
    except Exception:
        return 64 << 20        # conservative fallback (v7x per-TC physical VMEM)


def probe_direction_removal(hidden_states, Q, *, strength=1.0, normalize=False,
                            row_tile=None):
    """hidden_states: (B, S, H); Q: (H, R) with orthogonal columns (QR/orth output)."""
    B, S, H = hidden_states.shape
    Hq, R = Q.shape
    assert Hq == H
    rows = B * S
    itemsize = jnp.dtype(hidden_states.dtype).itemsize

    # --- hoist Q preprocessing out of the kernel -------------------------------
    Qf = Q.astype(jnp.float32)
    qnorm2 = jnp.sum(Qf * Qf, axis=0, keepdims=True)                  # (1, R)
    Qs = Qf / qnorm2                                                  # scaled for coeff matmul
    Qt = Qf.T                                                         # (R, H) unscaled, lane-dense

    # pad rank to a multiple of 128 (lane-dense coeff tile); zero pads contribute nothing
    Rp = 128 * pl.cdiv(R, 128)
    if Rp != R:
        Qs = jnp.pad(Qs, ((0, 0), (0, Rp - R)))
        Qt = jnp.pad(Qt, ((0, Rp - R), (0, 0)))

    # feed the MXU in the activation dtype when it is bf16-native
    q_dtype = hidden_states.dtype if hidden_states.dtype == jnp.bfloat16 else jnp.float32
    Qs = Qs.astype(q_dtype)
    Qt = Qt.astype(q_dtype)

    # --- tile sizing: mem-bound kernel, use the biggest row tile VMEM allows ---
    vmem_cap = _vmem_capacity_bytes()
    if row_tile is None:
        buf_budget = int(0.55 * vmem_cap)                 # in+out, double-buffered
        bytes_per_row = 4 * H * itemsize                  # 2 bufs x (in + out)
        t = max(8, min(1024, buf_budget // max(bytes_per_row, 1)))
        t = (t // 8) * 8
        row_tile = min(t, 8 * pl.cdiv(rows, 8))
        # keep >= 2 grid steps so both v7x TensorCores get work
        while row_tile > 8 and pl.cdiv(rows, row_tile) < 2:
            row_tile = max(8, ((row_tile // 2) // 8) * 8)

    padded_rows = row_tile * pl.cdiv(rows, row_tile)
    h2d = hidden_states.reshape(rows, H)
    if padded_rows != rows:
        h2d = jnp.pad(h2d, ((0, padded_rows - rows), (0, 0)))

    grid = (padded_rows // row_tile,)

    # VMEM budget for the compiler: double-buffered in/out tiles + both Q operands.
    tile_bytes = row_tile * H * itemsize
    q_bytes = 2 * H * Rp * jnp.dtype(q_dtype).itemsize
    needed = 4 * tile_bytes + 2 * q_bytes + (2 << 20)
    vmem_limit = int(min(max(needed, 32 << 20), vmem_cap - (4 << 20)))

    cost = pl.CostEstimate(
        flops=4 * padded_rows * H * Rp,                               # two matmuls
        transcendentals=(2 * padded_rows) if normalize else 0,
        bytes_accessed=2 * padded_rows * H * itemsize + q_bytes,
    )

    kernel = functools.partial(_probe_removal_kernel,
                               strength=float(strength),
                               normalize=bool(normalize))

    out2d = pl.pallas_call(
        kernel,
        out_shape=jax.ShapeDtypeStruct((padded_rows, H), hidden_states.dtype),
        grid_spec=pltpu.PrefetchScalarGridSpec(
            num_scalar_prefetch=0,
            grid=grid,
            in_specs=[
                pl.BlockSpec((row_tile, H), lambda i: (i, 0)),        # hidden tile
                pl.BlockSpec((H, Rp), lambda i: (0, 0)),              # Qs (stationary)
                pl.BlockSpec((Rp, H), lambda i: (0, 0)),              # Qt (stationary)
            ],
            out_specs=pl.BlockSpec((row_tile, H), lambda i: (i, 0)),
        ),
        compiler_params=pltpu.CompilerParams(
            dimension_semantics=("parallel",),
            vmem_limit_bytes=vmem_limit),
        cost_estimate=cost,
    )(h2d, Qs, Qt)

    return out2d[:rows].reshape(B, S, H)


# ------------------------ parameter construction (glue) ---------------------- #

def make_Q(probe_weight, use_complement=False):
    """probe_weight: (K, H).  Mirrors scipy orth / orth_compl on probe_weight.T."""
    A = probe_weight.T                                   # (H, K)
    if use_complement:
        Qfull, _ = jnp.linalg.qr(A, mode="complete")     # (H, H)
        r = A.shape[1]                                   # synthetic W is full rank
        return Qfull[:, r:]                              # orthogonal complement
    Qred, _ = jnp.linalg.qr(A)                           # (H, K)
    return Qred


# ------------------------------ reference (JAX) ------------------------------ #

def ref_forward(h, Q, *, strength=1.0, normalize=False):
    h = h.astype(jnp.float32)
    if normalize:
        old = jnp.linalg.norm(h, axis=2, keepdims=True)
    for j in range(Q.shape[1]):                          # sequential batch_gs loop
        q = Q[:, j]
        coeff = jnp.einsum("bsh,h->bs", h, q) / jnp.dot(q, q)
        h = h - strength * coeff[..., None] * q
    if normalize:
        new = jnp.linalg.norm(h, axis=2, keepdims=True)
        h = h / new * old
    return h


# ----------------------------------- main ------------------------------------ #

if __name__ == "__main__":
    B, S, H, K = 2, 8, 32, 4      # batch, seq, hidden, probe rank
    strength = 1.0
    normalize = True
    use_complement = False        # TODO(synk): `passthrough` flag is a host-side early return, not a kernel op

    key = jax.random.PRNGKey(0)
    k_h, k_w = jax.random.split(key)
    hidden_states = jax.random.normal(k_h, (B, S, H), dtype=jnp.float32)
    probe_weight = jax.random.normal(k_w, (K, H), dtype=jnp.float32)

    Q = make_Q(probe_weight, use_complement=use_complement)   # (H, K)

    out = probe_direction_removal(hidden_states, Q,
                                  strength=strength, normalize=normalize)
    out = jax.block_until_ready(out)

    expected = ref_forward(hidden_states, Q, strength=strength, normalize=normalize)
    assert out.shape == (B, S, H)
    assert jnp.allclose(out, expected, atol=1e-4, rtol=1e-4)

    print("KERNEL_OK")
</pallas_src>

<mosaic_0001>
module attributes {stable_mosaic.version = 11 : i64} {
  func.func @_probe_removal_kernel(%arg0: i32, %arg1: memref<8x32xf32, #tpu.memory_space<vmem>>, %arg2: memref<32x128xf32, #tpu.memory_space<vmem>>, %arg3: memref<128x32xf32, #tpu.memory_space<vmem>>, %arg4: memref<8x32xf32, #tpu.memory_space<vmem>>) attributes {dimension_semantics = [#tpu.dimension_semantics<parallel>], iteration_bounds = array<i64: 2>, scalar_prefetch = 0 : i64, scratch_operands = 0 : i64, tpu.core_type = #tpu.core_type<tc>, window_params = [{transform_indices = @transform_0, window_bounds = array<i64: 8, 32>}, {pipeline_mode = #tpu.pipeline_mode<synchronous>, transform_indices = @transform_1, window_bounds = array<i64: 32, 128>}, {pipeline_mode = #tpu.pipeline_mode<synchronous>, transform_indices = @transform_2, window_bounds = array<i64: 128, 32>}, {transform_indices = @transform_3, window_bounds = array<i64: 8, 32>}]} {
    %c0 = arith.constant 0 : index
    %c0_0 = arith.constant 0 : index
    %0 = vector.load %arg1[%c0, %c0_0] : memref<8x32xf32, #tpu.memory_space<vmem>>, vector<8x32xf32>
    %c0_1 = arith.constant 0 : index
    %c0_2 = arith.constant 0 : index
    %1 = vector.load %arg2[%c0_1, %c0_2] : memref<32x128xf32, #tpu.memory_space<vmem>>, vector<32x128xf32>
    %cst = arith.constant dense<0.000000e+00> : vector<8x128xf32>
    %2 = tpu.matmul %0, %1, %cst {dimension_numbers = #tpu.dot_dimension_numbers<[1], [0], [0], [1], [0, 0, 1, 1], [], []>} : vector<8x32xf32>, vector<32x128xf32>, vector<8x128xf32> -> vector<8x128xf32>
    %c0_3 = arith.constant 0 : index
    %c0_4 = arith.constant 0 : index
    %3 = vector.load %arg3[%c0_3, %c0_4] : memref<128x32xf32, #tpu.memory_space<vmem>>, vector<128x32xf32>
    %cst_5 = arith.constant dense<0.000000e+00> : vector<8x32xf32>
    %4 = tpu.matmul %2, %3, %cst_5 {dimension_numbers = #tpu.dot_dimension_numbers<[1], [0], [0], [1], [0, 0, 1, 1], [], []>} : vector<8x128xf32>, vector<128x32xf32>, vector<8x32xf32> -> vector<8x32xf32>
    %cst_6 = arith.constant 1.000000e+00 : f32
    %5 = vector.broadcast %cst_6 : f32 to vector<8x32xf32>
    %6 = arith.mulf %5, %4 : vector<8x32xf32>
    %7 = arith.subf %0, %6 : vector<8x32xf32>
    %8 = arith.mulf %0, %0 : vector<8x32xf32>
    %cst_7 = arith.constant dense<0.000000e+00> : vector<8xf32>
    %9 = vector.multi_reduction <add>, %8, %cst_7 [1] : vector<8x32xf32> to vector<8xf32>
    %10 = vector.shape_cast %9 : vector<8xf32> to vector<8x1xf32>
    %11 = arith.mulf %7, %7 : vector<8x32xf32>
    %cst_8 = arith.constant dense<0.000000e+00> : vector<8xf32>
    %12 = vector.multi_reduction <add>, %11, %cst_8 [1] : vector<8x32xf32> to vector<8xf32>
    %13 = vector.shape_cast %12 : vector<8xf32> to vector<8x1xf32>
    %14 = math.sqrt %10 : vector<8x1xf32>
    %cst_9 = arith.constant 9.99999996E-13 : f32
    %15 = vector.broadcast %cst_9 : f32 to vector<8x1xf32>
    %16 = arith.maximumf %13, %15 : vector<8x1xf32>
    %17 = math.rsqrt %16 : vector<8x1xf32>
    %18 = arith.mulf %14, %17 : vector<8x1xf32>
    %19 = vector.broadcast %18 : vector<8x1xf32> to vector<8x32xf32>
    %20 = arith.mulf %7, %19 : vector<8x32xf32>
    %c0_10 = arith.constant 0 : index
    %c0_11 = arith.constant 0 : index
    %21 = vector.load %arg4[%c0_10, %c0_11] : memref<8x32xf32, #tpu.memory_space<vmem>>, vector<8x32xf32>
    tpu.vector_store %arg4[%c0_10, %c0_11], %20 {strides = array<i32>} : memref<8x32xf32, #tpu.memory_space<vmem>>, vector<8x32xf32>,
    return
  }
  func.func @transform_0(%arg0: i32) -> (i32, i32) {
    %c0_i32 = arith.constant 0 : i32
    %c0_i32_0 = arith.constant 0 : i32
    return %arg0, %c0_i32 : i32, i32
  }
  func.func @transform_1(%arg0: i32) -> (i32, i32) {
    %c0_i32 = arith.constant 0 : i32
    %c0_i32_0 = arith.constant 0 : i32
    %c0_i32_1 = arith.constant 0 : i32
    return %c0_i32, %c0_i32_0 : i32, i32
  }
  func.func @transform_2(%arg0: i32) -> (i32, i32) {
    %c0_i32 = arith.constant 0 : i32
    %c0_i32_0 = arith.constant 0 : i32
    %c0_i32_1 = arith.constant 0 : i32
    return %c0_i32, %c0_i32_0 : i32, i32
  }
  func.func @transform_3(%arg0: i32) -> (i32, i32) {
    %c0_i32 = arith.constant 0 : i32
    %c0_i32_0 = arith.constant 0 : i32
    return %arg0, %c0_i32 : i32, i32
  }
}

</mosaic_0001>

<llo_original>
// kernel: tpu_custom_call.1
$region0: #{tpu_custom_call.1}
  #allocation0 [shape = 'u32[]', space=smem, size = 0x4, offset = 0x4, fixed_abs, tag = 'smem constant byte address 0x4 - core index']
  #allocation1 [shape = 'u32[72,128]{1,0:T(1,128)}', space=vmem, size = 0x9000, scoped, tag = 'internal scratch']
  %s0 = inlined_call_operand.vmem [shape: f32[16,32], index: 0, kind: input, shape index: {}]
  %s1 = inlined_call_operand.vmem [shape: f32[32,128], index: 1, kind: input, shape index: {}]
  %s2 = inlined_call_operand.vmem [shape: f32[128,32], index: 2, kind: input, shape index: {}]
  %s3 = inlined_call_operand.hbm [shape: f32[16,32], index: 3, kind: output, shape index: {}]
  %s4 = sld [smem:[#allocation0]]
  $region45: #{tpu_custom_call.1} parent=0
    _
  %s6 = ssub.s32 1, %s4
  %s7 = scalar_select 0, %s6, %s4
  $region1: #{tpu_custom_call.1} parent=0
    #allocation2 [shape = 'u8[8192]{0}', space=vmem, size = 0x2000, scoped, tag = 'output window, operand 0']
    #allocation3 [shape = 's32[2]{0}', space=sflag, size = 0x8, scoped, tag = 'scoped memory for tpu_custom_call.1']
    %8 = vsyncpa [#allocation3], 0
    %s9 = scalar_lea.sflag [#allocation3], 1
    %10 = vsyncpa %s9, 0
    loop: start=0, step=1, limit=4
    $region2: #{tpu_custom_call.1} parent=1 // loop_pre_header
      _
    $region3: #{tpu_custom_call.1} parent=1 // loop_header
      %s12 = sphi 0, %s16
      %p13 = scmp.ge.s32.totalorder %s12, 4
      %s22 = sphi 0, %s24
      %s25 = sphi 0, %s22
      %s26 = sphi 0, %s25
      %s42 = sphi 0, %s26
      %s46 = sphi 0, %s46
      %s48 = sphi 0, %s46
      %s49 = sphi 0, %s48
      %s63 = sphi 0, %s49
      %s67 = sphi 0, %s67
      %s69 = sphi 0, %s67
      %s70 = sphi 0, %s69
      %s84 = sphi 0, %s70
      %s90 = sphi 0, %s92
      %s93 = sphi 0, %s90
      %s94 = sphi 0, %s93
      %s110 = sphi 0, %s94
    $region4: #{tpu_custom_call.1} parent=1 // loop_header_branch
      %15 = sbr.rel (%p13) target = $region8
    $region5: #{tpu_custom_call.1} parent=1 // loop_body
      %s17 = ssub.s32 %s12, 1
      %s18 = ssub.s32 %s12, 2
      %s19 = sadd.s32 %s12, 1
      %s20 = ssub.s32 %s12, %s19
      %p21 = scmp.eq.s32.totalorder %s20, 0
      %s23 = sadd.s32 %s22, 1
      %s24 = scalar_select %p21, %s22, %s23
      %p27 = pneg %p21
      %p28 = scmp.eq.s32.totalorder %s12, 1
      %p29 = por %p27, %p28
      %p30 = scmp.ne.s32.totalorder %s22, %s25
      %p31 = scmp.eq.s32.totalorder %s12, 0
      %p32 = por %p30, %p31
      %p33 = scmp.ne.s32.totalorder %s22, %s25
      %p34 = scmp.eq.s32.totalorder %s17, 1
      %p35 = por %p33, %p34
      %p36 = scmp.ne.s32.totalorder %s25, %s26
      %p37 = scmp.eq.s32.totalorder %s17, 0
      %p38 = por %p36, %p37
      %p39 = scmp.ne.s32.totalorder %s25, %s26
      %p40 = scmp.eq.s32.totalorder %s18, 1
      %p41 = por %p39, %p40
      %p43 = scmp.ne.s32.totalorder %s26, %s42
      %p44 = scmp.eq.s32.totalorder %s18, 0
      %p45 = por %p43, %p44
      %s47 = sadd.s32 %s46, 1
      %p50 = scmp.eq.s32.totalorder %s12, 1
      %p51 = scmp.ne.s32.totalorder %s46, %s48
      %p52 = scmp.eq.s32.totalorder %s12, 0
      %p53 = por %p51, %p52
      %p54 = scmp.ne.s32.totalorder %s46, %s48
      %p55 = scmp.eq.s32.totalorder %s17, 1
      %p56 = por %p54, %p55
      %p57 = scmp.ne.s32.totalorder %s48, %s49
      %p58 = scmp.eq.s32.totalorder %s17, 0
      %p59 = por %p57, %p58
      %p60 = scmp.ne.s32.totalorder %s48, %s49
      %p61 = scmp.eq.s32.totalorder %s18, 1
      %p62 = por %p60, %p61
      %p64 = scmp.ne.s32.totalorder %s49, %s63
      %p65 = scmp.eq.s32.totalorder %s18, 0
      %p66 = por %p64, %p65
      %s68 = sadd.s32 %s67, 1
      %p71 = scmp.eq.s32.totalorder %s12, 1
      %p72 = scmp.ne.s32.totalorder %s67, %s69
      %p73 = scmp.eq.s32.totalorder %s12, 0
      %p74 = por %p72, %p73
      %p75 = scmp.ne.s32.totalorder %s67, %s69
      %p76 = scmp.eq.s32.totalorder %s17, 1
      %p77 = por %p75, %p76
      %p78 = scmp.ne.s32.totalorder %s69, %s70
      %p79 = scmp.eq.s32.totalorder %s17, 0
      %p80 = por %p78, %p79
      %p81 = scmp.ne.s32.totalorder %s69, %s70
      %p82 = scmp.eq.s32.totalorder %s18, 1
      %p83 = por %p81, %p82
      %p85 = scmp.ne.s32.totalorder %s70, %s84
      %p86 = scmp.eq.s32.totalorder %s18, 0
      %p87 = por %p85, %p86
      %s88 = ssub.s32 %s12, %s19
      %p89 = scmp.eq.s32.totalorder %s88, 0
      %s91 = sadd.s32 %s90, 1
      %s92 = scalar_select %p89, %s90, %s91
      %p95 = pneg %p89
      %p96 = scmp.eq.s32.totalorder %s12, 1
      %p97 = por %p95, %p96
      %p98 = scmp.ne.s32.totalorder %s90, %s93
      %p99 = scmp.eq.s32.totalorder %s12, 0
      %p100 = por %p98, %p99
      %p101 = scmp.ne.s32.totalorder %s90, %s93
      %p102 = scmp.eq.s32.totalorder %s17, 1
      %p103 = por %p101, %p102
      %p104 = scmp.ne.s32.totalorder %s93, %s94
      %p105 = scmp.eq.s32.totalorder %s17, 0
      %p106 = por %p104, %p105
      %p107 = scmp.ne.s32.totalorder %s93, %s94
      %p108 = scmp.eq.s32.totalorder %s18, 1
      %p109 = por %p107, %p108
      %p111 = scmp.ne.s32.totalorder %s94, %s110
      %p112 = scmp.eq.s32.totalorder %s18, 0
      %p113 = por %p111, %p112
      %p114 = scmp.le.s32.totalorder 1, %s12
      %p115 = scmp.lt.s32.totalorder %s12, 3
      %p116 = pnand %p114, %p115
      %p117 = pneg %p116
      // Predicated region
      $region9: #{tpu_custom_call.1} parent=5 // pred_check
        _
      $region10: #{tpu_custom_call.1} parent=5 // pred_check_branch
        %119 = sbr.rel (%p116) target = $region12
      $region11: #{tpu_custom_call.1} parent=5 // pred_region
        %s120 = ssub.s32 %s12, 1
        // Predicated region
        $region13: #{tpu_custom_call.1} parent=11 // pred_check
          %p121 = pneg %p59
        $region14: #{tpu_custom_call.1} parent=11 // pred_check_branch
          %123 = sbr.rel (%p121) target = $region16
        $region15: #{tpu_custom_call.1} parent=11 // pred_region
          _
        $region16: #{tpu_custom_call.1} parent=11 // pred_fallthru
          _
        // Predicated region
        $region17: #{tpu_custom_call.1} parent=11 // pred_check
          %p124 = pneg %p80
        $region18: #{tpu_custom_call.1} parent=11 // pred_check_branch
          %126 = sbr.rel (%p124) target = $region20
        $region19: #{tpu_custom_call.1} parent=11 // pred_region
          _
        $region20: #{tpu_custom_call.1} parent=11 // pred_fallthru
          _
      $region12: #{tpu_custom_call.1} parent=5 // pred_fallthru
        _
      %p127 = scmp.lt.s32.totalorder %s12, 2
      // Predicated region
      $region21: #{tpu_custom_call.1} parent=5 // pred_check
        %p128 = pneg %p127
      $region22: #{tpu_custom_call.1} parent=5 // pred_check_branch
        %130 = sbr.rel (%p128) target = $region24
      $region23: #{tpu_custom_call.1} parent=5 // pred_region
        // Predicated region
        $region25: #{tpu_custom_call.1} parent=23 // pred_check
          %p131 = pneg %p32
        $region26: #{tpu_custom_call.1} parent=23 // pred_check_branch
          %133 = sbr.rel (%p131) target = $region28
        $region27: #{tpu_custom_call.1} parent=23 // pred_region
          %p134 = scmp.lt.s32.totalorder %s12, 1
          %s135 = scalar_select %p134, %s12, 1
          %s136 = smul.addr %s135, 8
          %s137 = scalar_lea.vmem %s0, %s136
        $region28: #{tpu_custom_call.1} parent=23 // pred_fallthru
          _
      $region24: #{tpu_custom_call.1} parent=5 // pred_fallthru
        _
      %p138 = scmp.le.s32.totalorder 1, %s12
      %p139 = scmp.lt.s32.totalorder %s12, 3
      %p140 = pnand %p138, %p139
      %p141 = pneg %p140
      // Predicated region
      $region29: #{tpu_custom_call.1} parent=5 // pred_check
        _
      $region30: #{tpu_custom_call.1} parent=5 // pred_check_branch
        %143 = sbr.rel (%p140) target = $region32
      $region31: #{tpu_custom_call.1} parent=5 // pred_region
        %s144 = ssub.s32 %s12, 1
        %p145 = scmp.lt.s32.totalorder %s17, 1
        %s146 = scalar_select %p145, %s17, 1
        %s147 = smul.addr %s146, 8
        %s148 = scalar_lea.vmem %s0, %s147
        %p149 = pneg %p38
        %p150 = pneg %p35
        %p151 = pneg %p59
        %p152 = pneg %p56
        %p153 = pneg %p80
        %p154 = pneg %p77
        %p155 = pneg %p106
        %p156 = pneg %p103
        %s157 = sand.u32 %s93, 1
        %s158 = scalar_lea.sflag [#allocation3], %s157
        %s159 = sand.u32 %s93, 1
        %s160 = smul.addr %s159, 8
        %s161 = scalar_lea.vmem [#allocation2], %s160
        %p162 = scmp.lt.s32.totalorder %s17, 1
        %s163 = scalar_select %p162, %s17, 1
        %s164 = smul.addr %s163, 8
        %s165 = scalar_lea.vmem %s0, %s164
        %v166 = vld [vmem:[%s165] sm:$0xff]
        %v167 = vld [vmem:[%s1] sm:$0xff]
        %v168 = vld [vmem:[%s1 + $0x8] sm:$0xff]
        %v169 = vld [vmem:[%s1 + $0x10] sm:$0xff]
        %v170 = vld [vmem:[%s1 + $0x18] sm:$0xff]
        %vm171 = vcmask 261120
        %v173 = vsel %vm171, %v166, 0
        %175 = vmatpush.msra.mxu0 0.0
        %176 = vmatpush.msra.mxu0 0.0
        %177 = vmatpush.msra.mxu0 0.0
        %178 = vmatpush.msra.mxu0 0.0
        %179 = vmatpush.msra.mxu0 0.0
        %180 = vmatpush.msra.mxu0 0.0
        %181 = vmatpush.msra.mxu0 0.0
        %182 = vmatpush.msra.mxu0 0.0
        %183 = vmatpush.msra.mxu0 0.0
        %184 = vmatpush.msra.mxu0 0.0
        %185 = vmatpush.msra.mxu0 0.0
        %186 = vmatpush.msra.mxu0 0.0
        %187 = vmatpush.msra.mxu0 %v170
        %188 = vmatpush.msra.mxu0 %v169
        %189 = vmatpush.msra.mxu0 %v168
        %190 = vmatpush.msra.mxu0 %v167
        %191 = vmatmul.f32.gmra.mxu0 %v173
        %v192 = vpop.f32.mrf.mxu0
        %v193 = vadd.f32 0.0, %v192
        %194 = vdwg.mxu0
        %v195 = vld [vmem:[%s2] sm:$0xff]
        %v196 = vld [vmem:[%s2 + $0x8] sm:$0xff]
        %v197 = vld [vmem:[%s2 + $0x10] sm:$0xff]
        %v198 = vld [vmem:[%s2 + $0x18] sm:$0xff]
        %v199 = vld [vmem:[%s2 + $0x20] sm:$0xff]
        %v200 = vld [vmem:[%s2 + $0x28] sm:$0xff]
        %v201 = vld [vmem:[%s2 + $0x30] sm:$0xff]
        %v202 = vld [vmem:[%s2 + $0x38] sm:$0xff]
        %v203 = vld [vmem:[%s2 + $0x40] sm:$0xff]
        %v204 = vld [vmem:[%s2 + $0x48] sm:$0xff]
        %v205 = vld [vmem:[%s2 + $0x50] sm:$0xff]
        %v206 = vld [vmem:[%s2 + $0x58] sm:$0xff]
        %v207 = vld [vmem:[%s2 + $0x60] sm:$0xff]
        %v208 = vld [vmem:[%s2 + $0x68] sm:$0xff]
        %v209 = vld [vmem:[%s2 + $0x70] sm:$0xff]
        %v210 = vld [vmem:[%s2 + $0x78] sm:$0xff]
        %211 = vmatpush.msra.mxu0 %v210
        %212 = vmatpush.msra.mxu0 %v209
        %213 = vmatpush.msra.mxu0 %v208
        %214 = vmatpush.msra.mxu0 %v207
        %215 = vmatpush.msra.mxu0 %v206
        %216 = vmatpush.msra.mxu0 %v205
        %217 = vmatpush.msra.mxu0 %v204
        %218 = vmatpush.msra.mxu0 %v203
        %219 = vmatpush.msra.mxu0 %v202
        %220 = vmatpush.msra.mxu0 %v201
        %221 = vmatpush.msra.mxu0 %v200
        %222 = vmatpush.msra.mxu0 %v199
        %223 = vmatpush.msra.mxu0 %v198
        %224 = vmatpush.msra.mxu0 %v197
        %225 = vmatpush.msra.mxu0 %v196
        %226 = vmatpush.msra.mxu0 %v195
        %227 = vmatmul.f32.gmra.mxu0 %v193
        %v228 = vpop.f32.mrf.mxu0
        %v229 = vadd.f32 0.0, %v228
        %230 = vdwg.mxu0
        %v231 = vsub.f32 %v166, %v229
        %v232 = vmul.f32 %v166, %v166
        %v233 = vsel %vm171, %v232, 0.0
        %234 = vadd.xlane.f32.xlu0 %v233
        %v235 = vpop.xlane.xlu0 %234
        %v236 = vmul.f32 %v231, %v231
        %v237 = vsel %vm171, %v236, 0.0
        %238 = vadd.xlane.f32.xlu0 %v237
        %v239 = vpop.xlane.xlu0 %238
        %v240 = vrsqrt.pop %v235
        %v241 = vmul.f32 %v240, %v235
        %v242 = vmul.f32 %v241, %v240
        %v243 = vmul.f32 0.5, %v242
        %v244 = vsub.f32 1.5, %v243
        %v245 = vmul.f32 %v240, %v244
        %v246 = vmul.f32 %v235, %v245
        %vm247 = vcmp.eq.f32.partialorder %v235, inf
        %v248 = vsel %vm247, %v235, %v246
        %vm249 = vcmp.eq.f32.partialorder %v235, 0.0
        %v250 = vand.u32 %v235, 2147483648
        %v251 = vsel %vm249, %v250, %v248
        %v252 = vmax.f32 %v239, 1e-12
        %v253 = vrsqrt.pop %v252
        %v254 = vmul.f32 %v253, %v252
        %v255 = vmul.f32 %v254, %v253
        %v256 = vmul.f32 0.5, %v255
        %v257 = vsub.f32 1.5, %v256
        %v258 = vmul.f32 %v253, %v257
        %vm259 = vweird.f32 %v252
        %vm260 = vweird.f32 %v253
        %vm261 = vmor %vm259, %vm260
        %v262 = vsel %vm261, %v253, %v258
        %v263 = vmul.f32 %v251, %v262
        %v264 = vmul.f32 %v231, %v263
        %265 = vst.msk [vmem:[%s161] sm:$0xff] %vm171, %v264
        %s266 = sand.u32 %s93, 1
        %s267 = scalar_lea.sflag [#allocation3], %s266
        %s268 = sand.u32 %s93, 1
        %s269 = smul.addr %s268, 8
        %s270 = scalar_lea.vmem [#allocation2], %s269
        // Predicated region
        $region33: #{tpu_custom_call.1} parent=31 // pred_check
          %p271 = pneg %p103
        $region34: #{tpu_custom_call.1} parent=31 // pred_check_branch
          %273 = sbr.rel (%p271) target = $region36
        $region35: #{tpu_custom_call.1} parent=31 // pred_region
          %275 = vsyncadd %s267, 0
          %s276 = smul.addr %s17, 8
          %s277 = scalar_lea.hbm %s3, %s276
          %s279 = sshll.u32 %s270, 4
          %s280 = int_to_ptr.vmem [resolvable:$true] %s279
          %s281 = sshll.u32 %s277, 4
          %s282 = int_to_ptr.hbm [resolvable:$true] %s281
          %284 = dma.vmem_to_hbm [thread:$0]  %s280, 128, %s282, %s267
        $region36: #{tpu_custom_call.1} parent=31 // pred_fallthru
          _
      $region32: #{tpu_custom_call.1} parent=5 // pred_fallthru
        _
      %p285 = scmp.le.s32.totalorder 2, %s12
      // Predicated region
      $region37: #{tpu_custom_call.1} parent=5 // pred_check
        %p286 = pneg %p285
      $region38: #{tpu_custom_call.1} parent=5 // pred_check_branch
        %288 = sbr.rel (%p286) target = $region40
      $region39: #{tpu_custom_call.1} parent=5 // pred_region
        %s289 = ssub.s32 %s12, 2
        // Predicated region
        $region41: #{tpu_custom_call.1} parent=39 // pred_check
          %p290 = pneg %p109
        $region42: #{tpu_custom_call.1} parent=39 // pred_check_branch
          %292 = sbr.rel (%p290) target = $region44
        $region43: #{tpu_custom_call.1} parent=39 // pred_region
          %s293 = sand.u32 %s94, 1
          %s294 = scalar_lea.sflag [#allocation3], %s293
          %s295 = sand.u32 %s94, 1
          %s296 = smul.addr %s295, 8
          %s297 = scalar_lea.vmem [#allocation2], %s296
          %299 = dma.done %s294, 128
        $region44: #{tpu_custom_call.1} parent=39 // pred_fallthru
          _
      $region40: #{tpu_custom_call.1} parent=5 // pred_fallthru
        _
    $region6: #{tpu_custom_call.1} parent=1 // loop_footer
      %s16 = sadd.s32 1, %s12
    $region7: #{tpu_custom_call.1} parent=1 // loop_footer_branch
      %11 = sbr.rel target = $region3
    $region8: #{tpu_custom_call.1} parent=1 // loop_exit
      _
    %300 = vsyncpa [#allocation3], 1
    %s301 = scalar_lea.sflag [#allocation3], 1
    %302 = vsyncpa %s301, 1

</llo_original>
